<compile_context>
chip_gen: v7x
topology: tpu7x:2x2x1
jax: 0.10.0
libtpu: 0.0.40
codegen_flags: <defaults>
</compile_context>

<pallas_src>
import jax
import jax.numpy as jnp
from jax import lax
from jax.experimental import pallas as pl
from jax.experimental.pallas import tpu as pltpu


def _round_up(x, m):
    return ((x + m - 1) // m) * m


def classifier_kernel(z_ref, w1_ref, b1_ref, w2_ref, b2_ref, o_ref):
    # z_ref:  (TB, L)  batch tile of z in native layout (streamed from HBM)
    # w1_ref: (Hp, L)  first-layer weight, PyTorch layout (VMEM-resident)
    # b1_ref: (Hp, 1)  first-layer bias as a column
    # w2_ref: (Hp, 1)  second-layer weight as a column (zero-padded rows)
    # b2_ref: (1, 1)   scalar second-layer bias in SMEM
    # o_ref:  (1, TB)  lane-dense logits tile
    ht = lax.dot_general(
        w1_ref[...], z_ref[...],
        dimension_numbers=(((1,), (1,)), ((), ())),      # contract both on L
        preferred_element_type=jnp.float32,
    )                                                    # (Hp, TB), MXU, f32 accum
    ht = jnp.maximum(ht + b1_ref[...], 0.0)              # bias + ReLU on VPU
    # Second Linear (hidden -> 1): VPU multiply + sublane reduce.
    # TODO(synk): if bundle dumps show vreg-spill vld/vst here for very large
    # tiles, chunk this epilogue over 128-lane slices with an unrolled fori_loop.
    y = jnp.sum(ht * w2_ref[...], axis=0, keepdims=True)  # (1, TB)
    o_ref[...] = (y + b2_ref[0, 0]).astype(o_ref.dtype)


def _pick_tile(Bp, L, itemsize, tile_b=None):
    """Pick a 128-multiple tile that divides Bp, targets ~2 MiB of z per step,
    and keeps >=4 grid steps when the batch is large enough."""
    n128 = Bp // 128
    if tile_b is None:
        target = (2 << 20) // max(1, itemsize * L)   # ~2 MiB z tile
        target = max(512, min(8192, target))
    else:
        target = max(128, int(tile_b))
    target_blocks = max(1, target // 128)            # force multiple of 128
    # keep >= 4 grid steps when the batch allows (v7x 2 TCs + pipelining)
    cap = max(1, min(target_blocks, n128 // 4)) if n128 >= 4 else min(target_blocks, n128)
    cap = max(1, cap)
    tile_blocks = 1
    for d in range(cap, 0, -1):                      # largest divisor of n128 <= cap
        if n128 % d == 0:
            tile_blocks = d
            break
    return tile_blocks * 128


def classifier_forward(z, w1, b1, w2, b2, *, tile_b=None):
    """z: (B, latent_dim) -> (B,) logits, matching Classifier.forward semantics.

    Weights follow PyTorch nn.Linear conventions:
      w1: (H, L), b1: (H,), w2: (1, H), b2: (1,).
    If z arrives as bfloat16 from the producer, the matmul runs bf16 on the MXU
    (f32 accumulation); no standalone cast pass is performed here.
    """
    B, L = z.shape
    H = w1.shape[0]
    Hp = _round_up(H, 8)                 # sublane-align the hidden dim

    # Pad batch only to a 128 multiple (not to the tile); no-op when aligned.
    Bp = _round_up(B, 128)
    if Bp != B:
        z = jnp.pad(z, ((0, Bp - B), (0, 0)))

    itemsize = jnp.dtype(z.dtype).itemsize
    tile = _pick_tile(Bp, L, itemsize, tile_b)
    grid = Bp // tile

    # One-time prep of the small, VMEM-resident operands (outside the grid loop).
    cdt = z.dtype
    w1p = jnp.pad(w1, ((0, Hp - H), (0, 0))).astype(cdt)                 # (Hp, L)
    b1c = jnp.pad(b1, (0, Hp - H)).reshape(Hp, 1).astype(jnp.float32)    # (Hp, 1)
    w2c = (jnp.pad(w2.reshape(-1), (0, Hp - H))
           .reshape(Hp, 1).astype(jnp.float32))                          # (Hp, 1)
    b2s = jnp.asarray(b2, jnp.float32).reshape(1, 1)                     # SMEM scalar

    # Explicit VMEM budget: double-buffered z tile + output tile, resident W1/b1/w2,
    # plus the (Hp, tile) f32 matmul intermediate; headroom for Mosaic scratch.
    vmem_bytes = (2 * tile * L * itemsize            # z double-buffer
                  + 2 * 8 * tile * 4                 # (1, tile) output, 8-sublane padded, x2
                  + Hp * L * jnp.dtype(cdt).itemsize # W1
                  + 2 * Hp * 4                       # b1, w2 columns
                  + Hp * tile * 4)                   # matmul intermediate / epilogue
    vmem_limit = int(min(vmem_bytes + (4 << 20), 100 << 20))

    cost = pl.CostEstimate(
        flops=2 * Bp * L * Hp + 4 * Bp * Hp,
        transcendentals=0,
        bytes_accessed=(Bp * L * itemsize + Hp * L * jnp.dtype(cdt).itemsize
                        + 2 * Hp * 4 + 4 + Bp * 4),
    )

    out = pl.pallas_call(
        classifier_kernel,
        out_shape=jax.ShapeDtypeStruct((1, Bp), jnp.float32),
        grid_spec=pltpu.PrefetchScalarGridSpec(
            num_scalar_prefetch=0,
            grid=(grid,),
            in_specs=[
                pl.BlockSpec((tile, L), lambda i: (i, 0)),           # z tile (streamed)
                pl.BlockSpec((Hp, L), lambda i: (0, 0)),             # W1 (resident)
                pl.BlockSpec((Hp, 1), lambda i: (0, 0)),             # b1 column
                pl.BlockSpec((Hp, 1), lambda i: (0, 0)),             # w2 column
                pl.BlockSpec(memory_space=pltpu.MemorySpace.SMEM),   # b2 scalar
            ],
            out_specs=pl.BlockSpec((1, tile), lambda i: (0, i)),     # lane-dense logits
        ),
        compiler_params=pltpu.CompilerParams(
            dimension_semantics=("parallel",),   # batch tiles shard across TCs (v7x)
            vmem_limit_bytes=vmem_limit,
        ),
        cost_estimate=cost,
    )(z, w1p, b1c, w2c, b2s)

    return out[0, :B]  # drop batch padding; squeeze(-1) semantics


def init_params(key, latent_dim, hidden_dim=64):
    """Deterministic init mimicking PyTorch Linear default (uniform +/- 1/sqrt(fan_in))."""
    k1, k2, k3, k4 = jax.random.split(key, 4)
    bound1 = 1.0 / (latent_dim ** 0.5)
    bound2 = 1.0 / (hidden_dim ** 0.5)
    w1 = jax.random.uniform(k1, (hidden_dim, latent_dim), jnp.float32, -bound1, bound1)
    b1 = jax.random.uniform(k2, (hidden_dim,), jnp.float32, -bound1, bound1)
    w2 = jax.random.uniform(k3, (1, hidden_dim), jnp.float32, -bound2, bound2)
    b2 = jax.random.uniform(k4, (1,), jnp.float32, -bound2, bound2)
    return w1, b1, w2, b2


if __name__ == "__main__":
    key = jax.random.PRNGKey(0)
    k_params, k_z = jax.random.split(key)

    B, latent_dim, hidden_dim = 8, 32, 64
    w1, b1, w2, b2 = init_params(k_params, latent_dim, hidden_dim)
    z = jax.random.normal(k_z, (B, latent_dim), jnp.float32)

    logits = classifier_forward(z, w1, b1, w2, b2)
    logits = jax.block_until_ready(logits)

    # Reference check in plain JAX (same math as the PyTorch module)
    ref = (jnp.maximum(z @ w1.T + b1, 0.0) @ w2.T + b2)[:, 0]
    assert logits.shape == (B,)
    assert jnp.allclose(logits, ref, atol=1e-4, rtol=1e-4)

    print("KERNEL_OK")
</pallas_src>

<mosaic_0001>
module attributes {stable_mosaic.version = 11 : i64} {
  func.func @classifier_kernel(%arg0: i32, %arg1: memref<128x32xf32, #tpu.memory_space<vmem>>, %arg2: memref<64x32xf32, #tpu.memory_space<vmem>>, %arg3: memref<64x1xf32, #tpu.memory_space<vmem>>, %arg4: memref<64x1xf32, #tpu.memory_space<vmem>>, %arg5: memref<1x1xf32, #tpu.memory_space<smem>>, %arg6: memref<1x128xf32, #tpu.memory_space<vmem>>) attributes {dimension_semantics = [#tpu.dimension_semantics<parallel>], iteration_bounds = array<i64: 1>, scalar_prefetch = 0 : i64, scratch_operands = 0 : i64, tpu.core_type = #tpu.core_type<tc>, window_params = [{transform_indices = @transform_0, window_bounds = array<i64: 128, 32>}, {pipeline_mode = #tpu.pipeline_mode<synchronous>, transform_indices = @transform_1, window_bounds = array<i64: 64, 32>}, {pipeline_mode = #tpu.pipeline_mode<synchronous>, transform_indices = @transform_2, window_bounds = array<i64: 64, 1>}, {pipeline_mode = #tpu.pipeline_mode<synchronous>, transform_indices = @transform_3, window_bounds = array<i64: 64, 1>}, {transform_indices = @transform_4, window_bounds = array<i64: 1, 1>}, {transform_indices = @transform_5, window_bounds = array<i64: 1, 128>}]} {
    %c0 = arith.constant 0 : index
    %c0_0 = arith.constant 0 : index
    %0 = vector.load %arg2[%c0, %c0_0] : memref<64x32xf32, #tpu.memory_space<vmem>>, vector<64x32xf32>
    %c0_1 = arith.constant 0 : index
    %c0_2 = arith.constant 0 : index
    %1 = vector.load %arg1[%c0_1, %c0_2] : memref<128x32xf32, #tpu.memory_space<vmem>>, vector<128x32xf32>
    %cst = arith.constant dense<0.000000e+00> : vector<64x128xf32>
    %2 = tpu.matmul %0, %1, %cst {dimension_numbers = #tpu.dot_dimension_numbers<[1], [1], [0], [0], [0, 0, 1, 0], [], []>} : vector<64x32xf32>, vector<128x32xf32>, vector<64x128xf32> -> vector<64x128xf32>
    %c0_3 = arith.constant 0 : index
    %c0_4 = arith.constant 0 : index
    %3 = vector.load %arg3[%c0_3, %c0_4] : memref<64x1xf32, #tpu.memory_space<vmem>>, vector<64x1xf32>
    %4 = vector.broadcast %3 : vector<64x1xf32> to vector<64x128xf32>
    %5 = arith.addf %2, %4 : vector<64x128xf32>
    %cst_5 = arith.constant 0.000000e+00 : f32
    %6 = vector.broadcast %cst_5 : f32 to vector<64x128xf32>
    %7 = arith.maximumf %5, %6 : vector<64x128xf32>
    %c0_6 = arith.constant 0 : index
    %c0_7 = arith.constant 0 : index
    %8 = vector.load %arg4[%c0_6, %c0_7] : memref<64x1xf32, #tpu.memory_space<vmem>>, vector<64x1xf32>
    %9 = vector.broadcast %8 : vector<64x1xf32> to vector<64x128xf32>
    %10 = arith.mulf %7, %9 : vector<64x128xf32>
    %cst_8 = arith.constant dense<0.000000e+00> : vector<128xf32>
    %11 = vector.multi_reduction <add>, %10, %cst_8 [0] : vector<64x128xf32> to vector<128xf32>
    %12 = vector.shape_cast %11 : vector<128xf32> to vector<1x128xf32>
    %c0_9 = arith.constant 0 : index
    %c0_10 = arith.constant 0 : index
    %13 = memref.load %arg5[%c0_9, %c0_10] : memref<1x1xf32, #tpu.memory_space<smem>>
    %14 = vector.broadcast %13 : f32 to vector<1x128xf32>
    %15 = arith.addf %12, %14 : vector<1x128xf32>
    %c0_11 = arith.constant 0 : index
    %c0_12 = arith.constant 0 : index
    %16 = vector.load %arg6[%c0_11, %c0_12] : memref<1x128xf32, #tpu.memory_space<vmem>>, vector<1x128xf32>
    tpu.vector_store %arg6[%c0_11, %c0_12], %15 {strides = array<i32>} : memref<1x128xf32, #tpu.memory_space<vmem>>, vector<1x128xf32>,
    return
  }
  func.func @transform_0(%arg0: i32) -> (i32, i32) {
    %c0_i32 = arith.constant 0 : i32
    %c0_i32_0 = arith.constant 0 : i32
    return %arg0, %c0_i32 : i32, i32
  }
  func.func @transform_1(%arg0: i32) -> (i32, i32) {
    %c0_i32 = arith.constant 0 : i32
    %c0_i32_0 = arith.constant 0 : i32
    %c0_i32_1 = arith.constant 0 : i32
    return %c0_i32, %c0_i32_0 : i32, i32
  }
  func.func @transform_2(%arg0: i32) -> (i32, i32) {
    %c0_i32 = arith.constant 0 : i32
    %c0_i32_0 = arith.constant 0 : i32
    %c0_i32_1 = arith.constant 0 : i32
    return %c0_i32, %c0_i32_0 : i32, i32
  }
  func.func @transform_3(%arg0: i32) -> (i32, i32) {
    %c0_i32 = arith.constant 0 : i32
    %c0_i32_0 = arith.constant 0 : i32
    %c0_i32_1 = arith.constant 0 : i32
    return %c0_i32, %c0_i32_0 : i32, i32
  }
  func.func @transform_4(%arg0: i32) -> (i32, i32) {
    %c0_i32 = arith.constant 0 : i32
    %c0_i32_0 = arith.constant 0 : i32
    %c0_i32_1 = arith.constant 0 : i32
    return %c0_i32, %c0_i32_0 : i32, i32
  }
  func.func @transform_5(%arg0: i32) -> (i32, i32) {
    %c0_i32 = arith.constant 0 : i32
    %c0_i32_0 = arith.constant 0 : i32
    return %c0_i32, %arg0 : i32, i32
  }
}

</mosaic_0001>

<llo_original>
// kernel: tpu_custom_call.1
$region0: #{tpu_custom_call.1}
  #allocation0 [shape = 'u32[]', space=smem, size = 0x4, offset = 0x4, fixed_abs, tag = 'smem constant byte address 0x4 - core index']
  #allocation1 [shape = 'u32[144,128]{1,0:T(1,128)}', space=vmem, size = 0x12000, scoped, tag = 'internal scratch']
  #allocation2 [shape = 'f32[1,1]{1,0:T(1,128)S(6)}', space=smem, size = 0x200, scoped, tag = 'scoped memory for tpu_custom_call.1']
  %s0 = inlined_call_operand.vmem [shape: f32[128,32], index: 0, kind: input, shape index: {}]
  %s1 = inlined_call_operand.vmem [shape: f32[64,32], index: 1, kind: input, shape index: {}]
  %s2 = inlined_call_operand.vmem [shape: f32[64,1], index: 2, kind: input, shape index: {}]
  %s3 = inlined_call_operand.vmem [shape: f32[64,1], index: 3, kind: input, shape index: {}]
  %s4 = inlined_call_operand.<no memory space> [shape: f32[1,1], index: 4, kind: input, shape index: {}]
  %s5 = inlined_call_operand.hbm [shape: f32[1,128], index: 5, kind: output, shape index: {}]
  %s6 = sld [smem:[#allocation0]]
  $region30: #{tpu_custom_call.1} parent=0
    _
  %s8 = ssub.s32 1, %s6
  %s9 = scalar_select 0, %s8, %s6
  %10 = sst [smem:[#allocation2]] %s4
  $region1: #{tpu_custom_call.1} parent=0
    #allocation3 [shape = 'u8[512]{0}', space=vmem, size = 0x400, scoped, tag = 'output window, operand 0, single buffered']
    #allocation4 [shape = 's32[1]{0}', space=sflag, size = 0x4, scoped, tag = 'scoped memory for tpu_custom_call.1']
    %11 = vsyncpa [#allocation4], 0
    // Predicated region
    $region2: #{tpu_custom_call.1} parent=1 // pred_check
      _
    $region3: #{tpu_custom_call.1} parent=1 // pred_check_branch
      %13 = sbr.rel (0) target = $region5
    $region4: #{tpu_custom_call.1} parent=1 // pred_region
      _
    $region5: #{tpu_custom_call.1} parent=1 // pred_fallthru
      _
    // Predicated region
    $region6: #{tpu_custom_call.1} parent=1 // pred_check
      _
    $region7: #{tpu_custom_call.1} parent=1 // pred_check_branch
      %15 = sbr.rel (0) target = $region9
    $region8: #{tpu_custom_call.1} parent=1 // pred_region
      _
    $region9: #{tpu_custom_call.1} parent=1 // pred_fallthru
      _
    // Predicated region
    $region10: #{tpu_custom_call.1} parent=1 // pred_check
      _
    $region11: #{tpu_custom_call.1} parent=1 // pred_check_branch
      %17 = sbr.rel (0) target = $region13
    $region12: #{tpu_custom_call.1} parent=1 // pred_region
      _
    $region13: #{tpu_custom_call.1} parent=1 // pred_fallthru
      _
    // Predicated region
    $region14: #{tpu_custom_call.1} parent=1 // pred_check
      _
    $region15: #{tpu_custom_call.1} parent=1 // pred_check_branch
      %19 = sbr.rel (0) target = $region17
    $region16: #{tpu_custom_call.1} parent=1 // pred_region
      _
    $region17: #{tpu_custom_call.1} parent=1 // pred_fallthru
      _
    // Predicated region
    $region18: #{tpu_custom_call.1} parent=1 // pred_check
      _
    $region19: #{tpu_custom_call.1} parent=1 // pred_check_branch
      %21 = sbr.rel (0) target = $region21
    $region20: #{tpu_custom_call.1} parent=1 // pred_region
      _
    $region21: #{tpu_custom_call.1} parent=1 // pred_fallthru
      _
    %v22 = vld [vmem:[%s1] sm:$0xff]
    %v23 = vld [vmem:[%s1 + $0x8] sm:$0xff]
    %v24 = vld [vmem:[%s1 + $0x10] sm:$0xff]
    %v25 = vld [vmem:[%s1 + $0x18] sm:$0xff]
    %v26 = vld [vmem:[%s1 + $0x20] sm:$0xff]
    %v27 = vld [vmem:[%s1 + $0x28] sm:$0xff]
    %v28 = vld [vmem:[%s1 + $0x30] sm:$0xff]
    %v29 = vld [vmem:[%s1 + $0x38] sm:$0xff]
    %v30 = vld [vmem:[%s0] sm:$0xff]
    %v31 = vld [vmem:[%s0 + $0x8] sm:$0xff]
    %v32 = vld [vmem:[%s0 + $0x10] sm:$0xff]
    %v33 = vld [vmem:[%s0 + $0x18] sm:$0xff]
    %v34 = vld [vmem:[%s0 + $0x20] sm:$0xff]
    %v35 = vld [vmem:[%s0 + $0x28] sm:$0xff]
    %v36 = vld [vmem:[%s0 + $0x30] sm:$0xff]
    %v37 = vld [vmem:[%s0 + $0x38] sm:$0xff]
    %v38 = vld [vmem:[%s0 + $0x40] sm:$0xff]
    %v39 = vld [vmem:[%s0 + $0x48] sm:$0xff]
    %v40 = vld [vmem:[%s0 + $0x50] sm:$0xff]
    %v41 = vld [vmem:[%s0 + $0x58] sm:$0xff]
    %v42 = vld [vmem:[%s0 + $0x60] sm:$0xff]
    %v43 = vld [vmem:[%s0 + $0x68] sm:$0xff]
    %v44 = vld [vmem:[%s0 + $0x70] sm:$0xff]
    %v45 = vld [vmem:[%s0 + $0x78] sm:$0xff]
    %v46 = vld [vmem:[%s2] sm:$0xff]
    %v47 = vld [vmem:[%s2 + $0x8] sm:$0xff]
    %v48 = vld [vmem:[%s2 + $0x10] sm:$0xff]
    %v49 = vld [vmem:[%s2 + $0x18] sm:$0xff]
    %v50 = vld [vmem:[%s2 + $0x20] sm:$0xff]
    %v51 = vld [vmem:[%s2 + $0x28] sm:$0xff]
    %v52 = vld [vmem:[%s2 + $0x30] sm:$0xff]
    %v53 = vld [vmem:[%s2 + $0x38] sm:$0xff]
    %55 = vset.pattern.permute.xlu0 0
    %56 = vperm.xlu0 %55, %v46
    %v57 = vpop.permute.xlu0 %56
    %60 = vset.pattern.permute.xlu0 0
    %61 = vperm.xlu0 %60, %v47
    %v62 = vpop.permute.xlu0 %61
    %65 = vset.pattern.permute.xlu0 0
    %66 = vperm.xlu0 %65, %v48
    %v67 = vpop.permute.xlu0 %66
    %70 = vset.pattern.permute.xlu0 0
    %71 = vperm.xlu0 %70, %v49
    %v72 = vpop.permute.xlu0 %71
    %75 = vset.pattern.permute.xlu0 0
    %76 = vperm.xlu0 %75, %v50
    %v77 = vpop.permute.xlu0 %76
    %80 = vset.pattern.permute.xlu0 0
    %81 = vperm.xlu0 %80, %v51
    %v82 = vpop.permute.xlu0 %81
    %85 = vset.pattern.permute.xlu0 0
    %86 = vperm.xlu0 %85, %v52
    %v87 = vpop.permute.xlu0 %86
    %90 = vset.pattern.permute.xlu0 0
    %91 = vperm.xlu0 %90, %v53
    %v92 = vpop.permute.xlu0 %91
    %vm94 = vcmask 261120
    %v96 = vsel %vm94, %v22, 0
    %v99 = vsel %vm94, %v23, 0
    %v102 = vsel %vm94, %v24, 0
    %v105 = vsel %vm94, %v25, 0
    %v108 = vsel %vm94, %v26, 0
    %v111 = vsel %vm94, %v27, 0
    %v114 = vsel %vm94, %v28, 0
    %v117 = vsel %vm94, %v29, 0
    %v120 = vsel %vm94, %v30, 0
    %v123 = vsel %vm94, %v31, 0
    %v126 = vsel %vm94, %v32, 0
    %v129 = vsel %vm94, %v33, 0
    %v132 = vsel %vm94, %v34, 0
    %v135 = vsel %vm94, %v35, 0
    %v138 = vsel %vm94, %v36, 0
    %v141 = vsel %vm94, %v37, 0
    %v144 = vsel %vm94, %v38, 0
    %v147 = vsel %vm94, %v39, 0
    %v150 = vsel %vm94, %v40, 0
    %v153 = vsel %vm94, %v41, 0
    %v156 = vsel %vm94, %v42, 0
    %v159 = vsel %vm94, %v43, 0
    %v162 = vsel %vm94, %v44, 0
    %v165 = vsel %vm94, %v45, 0
    %167 = vmatprep.subr.mxu0 0.0
    %168 = vmatpush1.xpose.msra.mxu0 %v120
    %169 = vmatprep.subr.mxu0 0.0
    %170 = vmatpush1.xpose.msra.mxu0 %v123
    %171 = vmatprep.subr.mxu0 0.0
    %172 = vmatpush1.xpose.msra.mxu0 %v126
    %173 = vmatprep.subr.mxu0 0.0
    %174 = vmatpush1.xpose.msra.mxu0 %v129
    %175 = vmatprep.subr.mxu0 0.0
    %176 = vmatpush1.xpose.msra.mxu0 %v132
    %177 = vmatprep.subr.mxu0 0.0
    %178 = vmatpush1.xpose.msra.mxu0 %v135
    %179 = vmatprep.subr.mxu0 0.0
    %180 = vmatpush1.xpose.msra.mxu0 %v138
    %181 = vmatprep.subr.mxu0 0.0
    %182 = vmatpush1.xpose.msra.mxu0 %v141
    %183 = vmatprep.subr.mxu0 0.0
    %184 = vmatpush1.xpose.msra.mxu0 %v144
    %185 = vmatprep.subr.mxu0 0.0
    %186 = vmatpush1.xpose.msra.mxu0 %v147
    %187 = vmatprep.subr.mxu0 0.0
    %188 = vmatpush1.xpose.msra.mxu0 %v150
    %189 = vmatprep.subr.mxu0 0.0
    %190 = vmatpush1.xpose.msra.mxu0 %v153
    %191 = vmatprep.subr.mxu0 0.0
    %192 = vmatpush1.xpose.msra.mxu0 %v156
    %193 = vmatprep.subr.mxu0 0.0
    %194 = vmatpush1.xpose.msra.mxu0 %v159
    %195 = vmatprep.subr.mxu0 0.0
    %196 = vmatpush1.xpose.msra.mxu0 %v162
    %197 = vmatprep.subr.mxu0 0.0
    %198 = vmatpush1.xpose.msra.mxu0 %v165
    %199 = vmatprep.subr.mxu0 0.0
    %200 = vmatpush1.xpose.msra.mxu0 0.0
    %201 = vmatprep.subr.mxu0 0.0
    %202 = vmatpush1.xpose.msra.mxu0 0.0
    %203 = vmatprep.subr.mxu0 0.0
    %204 = vmatpush1.xpose.msra.mxu0 0.0
    %205 = vmatprep.subr.mxu0 0.0
    %206 = vmatpush1.xpose.msra.mxu0 0.0
    %207 = vmatprep.subr.mxu0 0.0
    %208 = vmatpush1.xpose.msra.mxu0 0.0
    %209 = vmatprep.subr.mxu0 0.0
    %210 = vmatpush1.xpose.msra.mxu0 0.0
    %211 = vmatprep.subr.mxu0 0.0
    %212 = vmatpush1.xpose.msra.mxu0 0.0
    %213 = vmatprep.subr.mxu0 0.0
    %214 = vmatpush1.xpose.msra.mxu0 0.0
    %215 = vmatprep.subr.mxu0 0.0
    %216 = vmatpush1.xpose.msra.mxu0 0.0
    %217 = vmatprep.subr.mxu0 0.0
    %218 = vmatpush1.xpose.msra.mxu0 0.0
    %219 = vmatprep.subr.mxu0 0.0
    %220 = vmatpush1.xpose.msra.mxu0 0.0
    %221 = vmatprep.subr.mxu0 0.0
    %222 = vmatpush1.xpose.msra.mxu0 0.0
    %223 = vmatprep.subr.mxu0 0.0
    %224 = vmatpush1.xpose.msra.mxu0 0.0
    %225 = vmatprep.subr.mxu0 0.0
    %226 = vmatpush1.xpose.msra.mxu0 0.0
    %227 = vmatprep.subr.mxu0 0.0
    %228 = vmatpush1.xpose.msra.mxu0 0.0
    %229 = vmatprep.subr.mxu0 0.0
    %230 = vmatpush1.xpose.msra.mxu0 0.0
    %231 = vmatprep.mubr.f32.mxu0 0.0
    %232 = vmatmul.mubr.f32.gmra.mrb[0].mxu0 %v96
    %v233 = vpop.f32.mrb[0].mxu0
    %v234 = vadd.f32 %v57, %v233
    %v235 = vpop.f32.mrb[0].mxu0
    %236 = vmatprep.mubr.f32.mxu0 0.0
    %237 = vmatmul.mubr.f32.gmra.mrb[0].mxu0 %v99
    %v238 = vpop.f32.mrb[0].mxu0
    %v239 = vadd.f32 %v62, %v238
    %v240 = vpop.f32.mrb[0].mxu0
    %241 = vmatprep.mubr.f32.mxu0 0.0
    %242 = vmatmul.mubr.f32.gmra.mrb[0].mxu0 %v102
    %v243 = vpop.f32.mrb[0].mxu0
    %v244 = vadd.f32 %v67, %v243
    %v245 = vpop.f32.mrb[0].mxu0
    %246 = vmatprep.mubr.f32.mxu0 0.0
    %247 = vmatmul.mubr.f32.gmra.mrb[0].mxu0 %v105
    %v248 = vpop.f32.mrb[0].mxu0
    %v249 = vadd.f32 %v72, %v248
    %v250 = vpop.f32.mrb[0].mxu0
    %251 = vmatprep.mubr.f32.mxu0 0.0
    %252 = vmatmul.mubr.f32.gmra.mrb[0].mxu0 %v108
    %v253 = vpop.f32.mrb[0].mxu0
    %v254 = vadd.f32 %v77, %v253
    %v255 = vpop.f32.mrb[0].mxu0
    %256 = vmatprep.mubr.f32.mxu0 0.0
    %257 = vmatmul.mubr.f32.gmra.mrb[0].mxu0 %v111
    %v258 = vpop.f32.mrb[0].mxu0
    %v259 = vadd.f32 %v82, %v258
    %v260 = vpop.f32.mrb[0].mxu0
    %261 = vmatprep.mubr.f32.mxu0 0.0
    %262 = vmatmul.mubr.f32.gmra.mrb[0].mxu0 %v114
    %v263 = vpop.f32.mrb[0].mxu0
    %v264 = vadd.f32 %v87, %v263
    %v265 = vpop.f32.mrb[0].mxu0
    %266 = vmatprep.mubr.f32.mxu0 0.0
    %267 = vmatmul.mubr.f32.gmra.mrb[0].mxu0 %v117
    %v268 = vpop.f32.mrb[0].mxu0
    %v269 = vadd.f32 %v92, %v268
    %v270 = vpop.f32.mrb[0].mxu0
    %271 = vdwg.mxu0
    %v272 = vmax.f32 %v234, 0.0
    %v273 = vmax.f32 %v239, 0.0
    %v274 = vmax.f32 %v244, 0.0
    %v275 = vmax.f32 %v249, 0.0
    %v276 = vmax.f32 %v254, 0.0
    %v277 = vmax.f32 %v259, 0.0
    %v278 = vmax.f32 %v264, 0.0
    %v279 = vmax.f32 %v269, 0.0
    %v280 = vld [vmem:[%s3] sm:$0xff]
    %v281 = vld [vmem:[%s3 + $0x8] sm:$0xff]
    %v282 = vld [vmem:[%s3 + $0x10] sm:$0xff]
    %v283 = vld [vmem:[%s3 + $0x18] sm:$0xff]
    %v284 = vld [vmem:[%s3 + $0x20] sm:$0xff]
    %v285 = vld [vmem:[%s3 + $0x28] sm:$0xff]
    %v286 = vld [vmem:[%s3 + $0x30] sm:$0xff]
    %v287 = vld [vmem:[%s3 + $0x38] sm:$0xff]
    %289 = vset.pattern.permute.xlu0 0
    %290 = vperm.xlu0 %289, %v280
    %v291 = vpop.permute.xlu0 %290
    %294 = vset.pattern.permute.xlu0 0
    %295 = vperm.xlu0 %294, %v281
    %v296 = vpop.permute.xlu0 %295
    %299 = vset.pattern.permute.xlu0 0
    %300 = vperm.xlu0 %299, %v282
    %v301 = vpop.permute.xlu0 %300
    %304 = vset.pattern.permute.xlu0 0
    %305 = vperm.xlu0 %304, %v283
    %v306 = vpop.permute.xlu0 %305
    %309 = vset.pattern.permute.xlu0 0
    %310 = vperm.xlu0 %309, %v284
    %v311 = vpop.permute.xlu0 %310
    %314 = vset.pattern.permute.xlu0 0
    %315 = vperm.xlu0 %314, %v285
    %v316 = vpop.permute.xlu0 %315
    %319 = vset.pattern.permute.xlu0 0
    %320 = vperm.xlu0 %319, %v286
    %v321 = vpop.permute.xlu0 %320
    %324 = vset.pattern.permute.xlu0 0
    %325 = vperm.xlu0 %324, %v287
    %v326 = vpop.permute.xlu0 %325
    %v328 = vmul.f32 %v272, %v291
    %v329 = vmul.f32 %v273, %v296
    %v330 = vmul.f32 %v274, %v301
    %v331 = vmul.f32 %v275, %v306
    %v332 = vmul.f32 %v276, %v311
    %v333 = vmul.f32 %v277, %v316
    %v334 = vmul.f32 %v278, %v321
    %v335 = vmul.f32 %v279, %v326
    %v336 = vadd.f32 %v328, %v329
    %v337 = vadd.f32 %v336, %v330
    %v338 = vadd.f32 %v337, %v331
    %v339 = vadd.f32 %v338, %v332
    %v340 = vadd.f32 %v339, %v333
    %v341 = vadd.f32 %v340, %v334
    %v342 = vadd.f32 %v341, %v335
    %v343 = vrot.slane %v342, 4
    %v344 = vadd.f32 %v342, %v343
    %v345 = vrot.slane %v344, 2
    %v346 = vadd.f32 %v344, %v345
    %v347 = vrot.slane %v346, 1
    %v348 = vadd.f32 %v346, %v347
    %s349 = sld [smem:[#allocation2]]
    %v350 = vstv %s349
    %v351 = vadd.f32 %v348, %v350
    %352 = vst [vmem:[#allocation3] sm:$0x1] %v351
    // Predicated region
    $region22: #{tpu_custom_call.1} parent=1 // pred_check
      _
    $region23: #{tpu_custom_call.1} parent=1 // pred_check_branch
      %354 = sbr.rel (0) target = $region25
    $region24: #{tpu_custom_call.1} parent=1 // pred_region
      %s356 = ssub.s32 16, 16
      %357 = vsyncadd [#allocation4], %s356
      %s359 = sshll.u32 [#allocation3], 4
      %s360 = int_to_ptr.vmem [resolvable:$true] %s359
      %362 = dma.vmem_to_hbm [thread:$0]  %s360, 16, %s5, [#allocation4]
    $region25: #{tpu_custom_call.1} parent=1 // pred_fallthru
      _
    // Predicated region
    $region26: #{tpu_custom_call.1} parent=1 // pred_check
      _
    $region27: #{tpu_custom_call.1} parent=1 // pred_check_branch
      %364 = sbr.rel (0) target = $region29
    $region28: #{tpu_custom_call.1} parent=1 // pred_region
      %365 = dma.done [#allocation4], 16
    $region29: #{tpu_custom_call.1} parent=1 // pred_fallthru
      _
    %366 = vsyncpa [#allocation4], 1

</llo_original>
